<compile_context>
chip_gen: v7x
topology: tpu7x:2x2x1
jax: 0.10.0
libtpu: 0.0.40
codegen_flags: <defaults>
</compile_context>

<pallas_src>
import functools

import jax
import jax.numpy as jnp
from jax.experimental import pallas as pl
from jax.experimental.pallas import tpu as pltpu

BIGN = 15.0
ONE = 1.0

_LANE = 128                      # lane tile quantum
_TARGET_BLOCK_BYTES = 2 << 20    # ~2 MiB of logits per block: with double-buffered
                                 # input + output (~8-9 MiB in flight) this fits the
                                 # default scoped VMEM on v5e (16 MiB), v6e (32 MiB)
                                 # and v7x (32 MiB) without raising vmem_limit_bytes.
_MAX_LANE_TILE = 8192            # cap lane tile so huge H*W still pipelines


def _cdiv(a, b):
    return -(-a // b)


def _round_up(x, m):
    return _cdiv(x, m) * m


def _gate_kernel(x_ref, bias_ref, out_ref, *, block_rows):
    # x_ref / out_ref: (TM, THW) tile.  bias_ref: full (rows_p, 1) column kept
    # resident in VMEM (constant index_map -> DMA'd once, never re-fetched),
    # sliced per row-tile and lane-broadcast by the VPU add.
    r0 = pl.multiple_of(pl.program_id(0) * block_rows, 8)
    out_ref[...] = x_ref[...] + bias_ref[pl.ds(r0, block_rows), :]


@functools.partial(jax.jit, static_argnames=("objinds",))
def gate_object_logit(logits, obj_latent, objinds: tuple):
    """JAX/Pallas equivalent of GateObjectLogit.forward.

    logits:     (B, nclasses, H, W) float (NCHW)
    obj_latent: (B, L) float
    objinds:    tuple of ints, len == nclasses
    """
    B, C, H, W = logits.shape
    assert C == len(objinds)

    # Glue (wrapper-side): gather presence and fold the gate into one bias add.
    obj_pres = obj_latent[:, jnp.asarray(objinds)].astype(logits.dtype)   # (B, C)
    bias = (BIGN * (obj_pres - ONE)).reshape(B * C, 1)                    # (rows, 1)

    rows, hw = B * C, H * W
    x = logits.reshape(rows, hw)

    itemsize = jnp.dtype(logits.dtype).itemsize
    sub = 8 * max(1, 4 // itemsize)          # sublane quantum: 8 f32 / 16 bf16

    # Lane (hw) tiling: 128-dense, balanced blocks capped at _MAX_LANE_TILE.
    hw_p = _round_up(hw, _LANE)
    n_lane_blocks = _cdiv(hw_p, _MAX_LANE_TILE)
    thw = _round_up(_cdiv(hw_p, n_lane_blocks), _LANE)
    hw_p = thw * n_lane_blocks

    # Row tiling: largest sublane-aligned tile under the per-block byte target,
    # balanced so padding waste stays minimal.
    rows_p = _round_up(rows, sub)
    tm_cap = max(sub, (_TARGET_BLOCK_BYTES // (thw * itemsize)) // sub * sub)
    n_row_blocks = _cdiv(rows_p, tm_cap)
    tm = _round_up(_cdiv(rows_p, n_row_blocks), sub)
    rows_p = tm * n_row_blocks

    padded = (rows_p != rows) or (hw_p != hw)
    if padded:
        x = jnp.pad(x, ((0, rows_p - rows), (0, hw_p - hw)))
        bias = jnp.pad(bias, ((0, rows_p - rows), (0, 0)))

    out = pl.pallas_call(
        functools.partial(_gate_kernel, block_rows=tm),
        out_shape=jax.ShapeDtypeStruct((rows_p, hw_p), logits.dtype),
        grid=(n_row_blocks, n_lane_blocks),
        in_specs=[
            pl.BlockSpec((tm, thw), lambda i, j: (i, j)),
            pl.BlockSpec((rows_p, 1), lambda i, j: (0, 0)),   # resident bias column
        ],
        out_specs=pl.BlockSpec((tm, thw), lambda i, j: (i, j)),
        # Alias output onto the input only when padding already produced a fresh
        # buffer (otherwise the alias would force XLA to copy the un-donated
        # jit input and cost extra bandwidth instead of saving it).
        input_output_aliases=({0: 0} if padded else {}),
        compiler_params=pltpu.CompilerParams(
            dimension_semantics=("parallel", "parallel")),
    )(x, bias)

    if padded:
        out = out[:rows, :hw]
    return out.reshape(B, C, H, W)


if __name__ == "__main__":
    key = jax.random.PRNGKey(0)
    k1, k2 = jax.random.split(key)

    # Small shapes consistent with the module's forward.
    B, H, W = 2, 16, 16
    L = 10                      # size of the categorical object latent
    objinds = (0, 2, 5, 7)      # nclasses = 4
    C = len(objinds)

    logits = jax.random.normal(k1, (B, C, H, W), dtype=jnp.float32)
    obj_latent = jax.random.uniform(k2, (B, L), dtype=jnp.float32)

    out = gate_object_logit(logits, obj_latent, objinds)
    out = jax.block_until_ready(out)

    # Reference check (plain JAX, mirrors the PyTorch forward exactly).
    obj_pres = obj_latent[:, jnp.asarray(objinds)][:, :, None, None]
    ref = logits - BIGN * (ONE - obj_pres)
    assert jnp.allclose(out, ref, atol=1e-6), "mismatch vs reference"

    print("KERNEL_OK")
</pallas_src>

<mosaic_0001>
module attributes {stable_mosaic.version = 11 : i64} {
  func.func @_gate_kernel(%arg0: i32, %arg1: i32, %arg2: memref<8x256xf32, #tpu.memory_space<vmem>>, %arg3: memref<8x1xf32, #tpu.memory_space<vmem>>, %arg4: memref<8x256xf32, #tpu.memory_space<vmem>>) attributes {dimension_semantics = [#tpu.dimension_semantics<parallel>, #tpu.dimension_semantics<parallel>], iteration_bounds = array<i64: 1, 1>, scalar_prefetch = 0 : i64, scratch_operands = 0 : i64, tpu.core_type = #tpu.core_type<tc>, window_params = [{transform_indices = @transform_0, window_bounds = array<i64: 8, 256>}, {pipeline_mode = #tpu.pipeline_mode<synchronous>, transform_indices = @transform_1, window_bounds = array<i64: 8, 1>}, {transform_indices = @transform_2, window_bounds = array<i64: 8, 256>}]} {
    %c8_i32 = arith.constant 8 : i32
    %0 = arith.muli %arg0, %c8_i32 : i32
    %1 = tpu.assume_multiple %0, 8 : i32
    %c0 = arith.constant 0 : index
    %c0_0 = arith.constant 0 : index
    %2 = vector.load %arg2[%c0, %c0_0] : memref<8x256xf32, #tpu.memory_space<vmem>>, vector<8x256xf32>
    %3 = arith.index_cast %1 : i32 to index
    %c0_1 = arith.constant 0 : index
    %4 = vector.load %arg3[%3, %c0_1] : memref<8x1xf32, #tpu.memory_space<vmem>>, vector<8x1xf32>
    %5 = vector.broadcast %4 : vector<8x1xf32> to vector<8x256xf32>
    %6 = arith.addf %2, %5 : vector<8x256xf32>
    %c0_2 = arith.constant 0 : index
    %c0_3 = arith.constant 0 : index
    %7 = vector.load %arg4[%c0_2, %c0_3] : memref<8x256xf32, #tpu.memory_space<vmem>>, vector<8x256xf32>
    tpu.vector_store %arg4[%c0_2, %c0_3], %6 {strides = array<i32>} : memref<8x256xf32, #tpu.memory_space<vmem>>, vector<8x256xf32>,
    return
  }
  func.func @transform_0(%arg0: i32, %arg1: i32) -> (i32, i32) {
    %c0_i32 = arith.constant 0 : i32
    return %arg0, %arg1 : i32, i32
  }
  func.func @transform_1(%arg0: i32, %arg1: i32) -> (i32, i32) {
    %c0_i32 = arith.constant 0 : i32
    %c0_i32_0 = arith.constant 0 : i32
    %c0_i32_1 = arith.constant 0 : i32
    return %c0_i32, %c0_i32_0 : i32, i32
  }
  func.func @transform_2(%arg0: i32, %arg1: i32) -> (i32, i32) {
    %c0_i32 = arith.constant 0 : i32
    return %arg0, %arg1 : i32, i32
  }
}

</mosaic_0001>

<llo_original>
// kernel: gate_object_logit.1
$region0: #{gate_object_logit.1}
  #allocation0 [shape = 'u32[]', space=smem, size = 0x4, offset = 0x4, fixed_abs, tag = 'smem constant byte address 0x4 - core index']
  #allocation1 [shape = 'u32[144,128]{1,0:T(1,128)}', space=vmem, size = 0x12000, scoped, tag = 'internal scratch']
  %s0 = inlined_call_operand.vmem [shape: f32[8,256], index: 0, kind: input, shape index: {}]
  %s1 = inlined_call_operand.vmem [shape: f32[8,1], index: 1, kind: input, shape index: {}]
  %s2 = inlined_call_operand.vmem [shape: f32[8,256], index: 2, kind: output, shape index: {}]
  %s3 = sld [smem:[#allocation0]]
  $region18: #{gate_object_logit.1} parent=0
    _
  %s5 = ssub.s32 1, %s3
  %s6 = scalar_select 0, %s5, %s3
  // Predicated region
  $region2: #{gate_object_logit.1} parent=0 // pred_check
    _
  $region3: #{gate_object_logit.1} parent=0 // pred_check_branch
    %8 = sbr.rel (0) target = $region5
  $region4: #{gate_object_logit.1} parent=0 // pred_region
    _
  $region5: #{gate_object_logit.1} parent=0 // pred_fallthru
    _
  // Predicated region
  $region6: #{gate_object_logit.1} parent=0 // pred_check
    _
  $region7: #{gate_object_logit.1} parent=0 // pred_check_branch
    %10 = sbr.rel (0) target = $region9
  $region8: #{gate_object_logit.1} parent=0 // pred_region
    _
  $region9: #{gate_object_logit.1} parent=0 // pred_fallthru
    _
  %s11 = smul.u32 0, 8
  %v12 = vld [vmem:[%s0] sm:$0xff]
  %v13 = vld [vmem:[%s0 + $0x8] sm:$0xff]
  %s14 = scalar_lea.vmem %s1, %s11
  %v15 = vld [vmem:[%s14] sm:$0xff]
  %17 = vset.pattern.permute.xlu0 0
  %18 = vperm.xlu0 %17, %v15
  %v19 = vpop.permute.xlu0 %18
  %v21 = vadd.f32 %v12, %v19
  %v22 = vadd.f32 %v13, %v19
  %23 = vst [vmem:[%s2] sm:$0xff] %v21
  %24 = vst [vmem:[%s2 + $0x8] sm:$0xff] %v22
  // Predicated region
  $region10: #{gate_object_logit.1} parent=0 // pred_check
    _
  $region11: #{gate_object_logit.1} parent=0 // pred_check_branch
    %26 = sbr.rel (0) target = $region13
  $region12: #{gate_object_logit.1} parent=0 // pred_region
    _
  $region13: #{gate_object_logit.1} parent=0 // pred_fallthru
    _
  // Predicated region
  $region14: #{gate_object_logit.1} parent=0 // pred_check
    _
  $region15: #{gate_object_logit.1} parent=0 // pred_check_branch
    %28 = sbr.rel (0) target = $region17
  $region16: #{gate_object_logit.1} parent=0 // pred_region
    _
  $region17: #{gate_object_logit.1} parent=0 // pred_fallthru
    _

</llo_original>
